<compile_context>
chip_gen: v7x
topology: tpu7x:2x2x1
jax: 0.10.0
libtpu: 0.0.40
codegen_flags: <defaults>
</compile_context>

<pallas_src>
import math

import jax
import jax.numpy as jnp
from jax.experimental import pallas as pl
from jax.experimental.pallas import tpu as pltpu


def _bilinear_upsample_matrix(in_size: int, dtype=jnp.float32) -> jnp.ndarray:
    """Interpolation matrix M (2*in_size, in_size) for scale_factor=2,
    mode='bilinear', align_corners=False (PyTorch half-pixel semantics)."""
    out_size = 2 * in_size
    j = jnp.arange(out_size, dtype=jnp.float32)
    src = (j + 0.5) / 2.0 - 0.5              # half-pixel source coordinate
    src = jnp.maximum(src, 0.0)              # PyTorch clamps src >= 0
    i0 = jnp.floor(src).astype(jnp.int32)
    i0 = jnp.minimum(i0, in_size - 1)
    i1 = jnp.minimum(i0 + 1, in_size - 1)
    w1 = src - i0.astype(jnp.float32)
    w0 = 1.0 - w1
    rows = jnp.arange(out_size)
    m = jnp.zeros((out_size, in_size), jnp.float32)
    m = m.at[rows, i0].add(w0)
    m = m.at[rows, i1].add(w1)
    return m.astype(dtype)


def _upsample_kernel(x_ref, wh_ref, wwt_ref, o_ref):
    # x_ref:   (B, H, W)     B channel-slabs of the input
    # wh_ref:  (2H, H) f32   row interpolation matrix
    # wwt_ref: (W, 2W)       column interpolation matrix (pre-transposed)
    # o_ref:   (2H, B*2W)    lane-dense output slab: column b*2W + p <-> slab b
    b, h, w = x_ref.shape
    x = x_ref[...].reshape(b * h, w)

    # Column interpolation for all B slabs in ONE MXU matmul: (B*H, W) @ (W, 2W).
    y = jnp.dot(x, wwt_ref[...], preferred_element_type=jnp.float32)      # (B*H, 2W) f32

    # Lay the B slabs side by side along lanes -> (H, B*2W), so the row pass is a
    # single lane-dense matmul instead of B tiny (2H,H)@(H,2W) ones.
    yt = jnp.concatenate([y[i * h:(i + 1) * h, :] for i in range(b)], axis=1)

    # Row interpolation: (2H, H) @ (H, B*2W).
    z = jnp.dot(wh_ref[...], yt, preferred_element_type=jnp.float32)      # (2H, B*2W)
    o_ref[...] = z.astype(o_ref.dtype)


def _choose_block(nc: int, h: int, w: int) -> int:
    """Slabs per grid step B: B*2W a multiple of 128 (lane-dense output),
    block well inside scoped VMEM on v5e/v6e/v7x, and >= 2 grid steps when
    possible (v7x has 2 TensorCores per chip)."""
    q = 128 // math.gcd(2 * w, 128)              # smallest B with (B*2W) % 128 == 0
    g_total = -(-nc // q)                         # total q-granules (nc padded up to q)
    bytes_per_slab = 4 * h * w * 18               # ~input + output + f32 temps, dbl-buffered
    vmem_budget = 6 * 1024 * 1024                 # conservative: fits v5e 16 MiB scoped default
    m_vmem = max(1, vmem_budget // (q * bytes_per_slab))
    m_code = max(1, 32 // q)                      # keep the unrolled lane-concat modest
    m_split = max(1, -(-g_total // 2))            # at most half the work per step -> >= 2 steps
    m = max(1, min(m_vmem, m_code, m_split))
    return m * q


def trivial_upsample(x: jnp.ndarray) -> jnp.ndarray:
    """x: (N, C, H, W) -> (N, C, 2H, 2W), bilinear, align_corners=False."""
    n, c, h, w = x.shape
    nc = n * c

    # TODO(synk): for very large H/W the dense interpolation matrices waste O(H)
    # MXU flops (only 2 nonzeros per row); a 2-tap VPU formulation (pltpu.roll +
    # weighted adds) would keep the kernel at the HBM roofline in that regime.

    b = _choose_block(nc, h, w)
    nc_pad = -(-nc // b) * b
    grid = nc_pad // b

    # bf16 activations use the native bf16 MXU path; f32 accumulation either way.
    w_dtype = jnp.bfloat16 if x.dtype == jnp.bfloat16 else jnp.float32
    wh = _bilinear_upsample_matrix(h, jnp.float32)           # (2H, H)
    wwt = _bilinear_upsample_matrix(w, w_dtype).T            # (W, 2W), pre-transposed

    x_flat = x.reshape(nc, h, w)
    if x.dtype != jnp.float32 and x.dtype != jnp.bfloat16:
        x_flat = x_flat.astype(jnp.float32)
    if nc_pad != nc:
        x_flat = jnp.pad(x_flat, ((0, nc_pad - nc), (0, 0), (0, 0)))

    out2d = pl.pallas_call(
        _upsample_kernel,
        out_shape=jax.ShapeDtypeStruct((2 * h, nc_pad * 2 * w), x.dtype),
        grid_spec=pltpu.PrefetchScalarGridSpec(
            num_scalar_prefetch=0,
            grid=(grid,),
            in_specs=[
                pl.BlockSpec((b, h, w), lambda i: (i, 0, 0)),
                pl.BlockSpec((2 * h, h), lambda i: (0, 0)),
                pl.BlockSpec((w, 2 * w), lambda i: (0, 0)),
            ],
            out_specs=pl.BlockSpec((2 * h, b * 2 * w), lambda i: (0, i)),
        ),
        compiler_params=pltpu.CompilerParams(
            dimension_semantics=("parallel",),
            vmem_limit_bytes=32 * 1024 * 1024,
        ),
    )(x_flat, wh, wwt)

    # Layout plumbing back to NCHW (cheap XLA transpose; the kernel stays lane-dense).
    out = out2d.reshape(2 * h, nc_pad, 2 * w)[:, :nc, :]
    out = jnp.transpose(out, (1, 0, 2)).reshape(n, c, 2 * h, 2 * w)
    return out


if __name__ == "__main__":
    key = jax.random.PRNGKey(0)
    N, C, H, W = 2, 4, 16, 16
    x = jax.random.normal(key, (N, C, H, W), dtype=jnp.float32)

    out = trivial_upsample(x)
    out = jax.block_until_ready(out)

    assert out.shape == (N, C, 2 * H, 2 * W), out.shape
    assert out.dtype == x.dtype

    # Plain-JAX reference using the same separable interpolation matrices
    # (matrices match PyTorch F.interpolate(scale_factor=2, mode='bilinear',
    #  align_corners=False) semantics).
    wh_ref = _bilinear_upsample_matrix(H)
    ww_ref = _bilinear_upsample_matrix(W)
    ref = jnp.einsum("oh,nchw,pw->ncop", wh_ref, x, ww_ref)
    assert jnp.allclose(out, ref, atol=1e-5, rtol=1e-5)

    print("KERNEL_OK")
</pallas_src>

<mosaic_0001>
module attributes {stable_mosaic.version = 11 : i64} {
  func.func @_upsample_kernel(%arg0: i32, %arg1: memref<4x16x16xf32, #tpu.memory_space<vmem>>, %arg2: memref<32x16xf32, #tpu.memory_space<vmem>>, %arg3: memref<16x32xf32, #tpu.memory_space<vmem>>, %arg4: memref<32x128xf32, #tpu.memory_space<vmem>>) attributes {dimension_semantics = [#tpu.dimension_semantics<parallel>], iteration_bounds = array<i64: 2>, scalar_prefetch = 0 : i64, scratch_operands = 0 : i64, tpu.core_type = #tpu.core_type<tc>, window_params = [{transform_indices = @transform_0, window_bounds = array<i64: 4, 16, 16>}, {pipeline_mode = #tpu.pipeline_mode<synchronous>, transform_indices = @transform_1, window_bounds = array<i64: 32, 16>}, {pipeline_mode = #tpu.pipeline_mode<synchronous>, transform_indices = @transform_2, window_bounds = array<i64: 16, 32>}, {transform_indices = @transform_3, window_bounds = array<i64: 32, 128>}]} {
    %c0 = arith.constant 0 : index
    %c0_0 = arith.constant 0 : index
    %c0_1 = arith.constant 0 : index
    %0 = vector.load %arg1[%c0, %c0_0, %c0_1] : memref<4x16x16xf32, #tpu.memory_space<vmem>>, vector<4x16x16xf32>
    %1 = vector.shape_cast %0 : vector<4x16x16xf32> to vector<64x16xf32>
    %c0_2 = arith.constant 0 : index
    %c0_3 = arith.constant 0 : index
    %2 = vector.load %arg3[%c0_2, %c0_3] : memref<16x32xf32, #tpu.memory_space<vmem>>, vector<16x32xf32>
    %cst = arith.constant dense<0.000000e+00> : vector<64x32xf32>
    %3 = tpu.matmul %1, %2, %cst {dimension_numbers = #tpu.dot_dimension_numbers<[1], [0], [0], [1], [0, 0, 1, 1], [], []>} : vector<64x16xf32>, vector<16x32xf32>, vector<64x32xf32> -> vector<64x32xf32>
    %4 = vector.extract_strided_slice %3 {offsets = [0, 0], sizes = [16, 32], strides = [1, 1]} : vector<64x32xf32> to vector<16x32xf32>
    %5 = vector.extract_strided_slice %3 {offsets = [16, 0], sizes = [16, 32], strides = [1, 1]} : vector<64x32xf32> to vector<16x32xf32>
    %6 = vector.extract_strided_slice %3 {offsets = [32, 0], sizes = [16, 32], strides = [1, 1]} : vector<64x32xf32> to vector<16x32xf32>
    %7 = vector.extract_strided_slice %3 {offsets = [48, 0], sizes = [16, 32], strides = [1, 1]} : vector<64x32xf32> to vector<16x32xf32>
    %8 = tpu.concatenate %4, %5, %6, %7 in 1 : vector<16x32xf32>, vector<16x32xf32>, vector<16x32xf32>, vector<16x32xf32> -> vector<16x128xf32>
    %c0_4 = arith.constant 0 : index
    %c0_5 = arith.constant 0 : index
    %9 = vector.load %arg2[%c0_4, %c0_5] : memref<32x16xf32, #tpu.memory_space<vmem>>, vector<32x16xf32>
    %cst_6 = arith.constant dense<0.000000e+00> : vector<32x128xf32>
    %10 = tpu.matmul %9, %8, %cst_6 {dimension_numbers = #tpu.dot_dimension_numbers<[1], [0], [0], [1], [0, 0, 1, 1], [], []>} : vector<32x16xf32>, vector<16x128xf32>, vector<32x128xf32> -> vector<32x128xf32>
    %c0_7 = arith.constant 0 : index
    %c0_8 = arith.constant 0 : index
    %11 = vector.load %arg4[%c0_7, %c0_8] : memref<32x128xf32, #tpu.memory_space<vmem>>, vector<32x128xf32>
    tpu.vector_store %arg4[%c0_7, %c0_8], %10 {strides = array<i32>} : memref<32x128xf32, #tpu.memory_space<vmem>>, vector<32x128xf32>,
    return
  }
  func.func @transform_0(%arg0: i32) -> (i32, i32, i32) {
    %c0_i32 = arith.constant 0 : i32
    %c0_i32_0 = arith.constant 0 : i32
    %c0_i32_1 = arith.constant 0 : i32
    return %arg0, %c0_i32, %c0_i32_0 : i32, i32, i32
  }
  func.func @transform_1(%arg0: i32) -> (i32, i32) {
    %c0_i32 = arith.constant 0 : i32
    %c0_i32_0 = arith.constant 0 : i32
    %c0_i32_1 = arith.constant 0 : i32
    return %c0_i32, %c0_i32_0 : i32, i32
  }
  func.func @transform_2(%arg0: i32) -> (i32, i32) {
    %c0_i32 = arith.constant 0 : i32
    %c0_i32_0 = arith.constant 0 : i32
    %c0_i32_1 = arith.constant 0 : i32
    return %c0_i32, %c0_i32_0 : i32, i32
  }
  func.func @transform_3(%arg0: i32) -> (i32, i32) {
    %c0_i32 = arith.constant 0 : i32
    %c0_i32_0 = arith.constant 0 : i32
    return %c0_i32, %arg0 : i32, i32
  }
}

</mosaic_0001>

<llo_original>
// kernel: tpu_custom_call.1
$region0: #{tpu_custom_call.1}
  #allocation0 [shape = 'u32[]', space=smem, size = 0x4, offset = 0x4, fixed_abs, tag = 'smem constant byte address 0x4 - core index']
  #allocation1 [shape = 'u32[144,128]{1,0:T(1,128)}', space=vmem, size = 0x12000, scoped, tag = 'internal scratch']
  %s0 = inlined_call_operand.hbm [shape: f32[8,16,16], index: 0, kind: input, shape index: {}]
  %s1 = inlined_call_operand.vmem [shape: f32[32,16], index: 1, kind: input, shape index: {}]
  %s2 = inlined_call_operand.vmem [shape: f32[16,32], index: 2, kind: input, shape index: {}]
  %s3 = inlined_call_operand.hbm [shape: f32[32,256], index: 3, kind: output, shape index: {}]
  %s4 = sld [smem:[#allocation0]]
  $region49: #{tpu_custom_call.1} parent=0
    _
  %s6 = ssub.s32 1, %s4
  %s7 = scalar_select 0, %s6, %s4
  $region1: #{tpu_custom_call.1} parent=0
    #allocation2 [shape = 'u8[65536]{0}', space=vmem, size = 0x10000, scoped, tag = 'input window, operand 0']
    #allocation3 [shape = 's32[2]{0}', space=sflag, size = 0x8, scoped, tag = 'scoped memory for tpu_custom_call.1']
    #allocation4 [shape = 's32[2]{0}', space=sflag, size = 0x8, scoped, tag = 'scoped memory for tpu_custom_call.1']
    #allocation5 [shape = 'u8[32768]{0}', space=vmem, size = 0x8000, scoped, tag = 'output window, operand 0']
    %8 = vsyncpa [#allocation3], 0
    %s9 = scalar_lea.sflag [#allocation3], 1
    %10 = vsyncpa %s9, 0
    %11 = vsyncpa [#allocation4], 0
    %s12 = scalar_lea.sflag [#allocation4], 1
    %13 = vsyncpa %s12, 0
    loop: start=0, step=1, limit=4
    $region2: #{tpu_custom_call.1} parent=1 // loop_pre_header
      _
    $region3: #{tpu_custom_call.1} parent=1 // loop_header
      %s15 = sphi 0, %s19
      %p16 = scmp.ge.s32.totalorder %s15, 4
      %s25 = sphi 0, %s27
      %s28 = sphi 0, %s25
      %s29 = sphi 0, %s28
      %s45 = sphi 0, %s29
      %s49 = sphi 0, %s49
      %s51 = sphi 0, %s49
      %s52 = sphi 0, %s51
      %s66 = sphi 0, %s52
      %s70 = sphi 0, %s70
      %s72 = sphi 0, %s70
      %s73 = sphi 0, %s72
      %s87 = sphi 0, %s73
      %s93 = sphi 0, %s95
      %s96 = sphi 0, %s93
      %s97 = sphi 0, %s96
      %s113 = sphi 0, %s97
    $region4: #{tpu_custom_call.1} parent=1 // loop_header_branch
      %18 = sbr.rel (%p16) target = $region8
    $region5: #{tpu_custom_call.1} parent=1 // loop_body
      %s20 = ssub.s32 %s15, 1
      %s21 = ssub.s32 %s15, 2
      %s22 = sadd.s32 %s15, 1
      %s23 = ssub.s32 %s15, %s22
      %p24 = scmp.eq.s32.totalorder %s23, 0
      %s26 = sadd.s32 %s25, 1
      %s27 = scalar_select %p24, %s25, %s26
      %p30 = pneg %p24
      %p31 = scmp.eq.s32.totalorder %s15, 1
      %p32 = por %p30, %p31
      %p33 = scmp.ne.s32.totalorder %s25, %s28
      %p34 = scmp.eq.s32.totalorder %s15, 0
      %p35 = por %p33, %p34
      %p36 = scmp.ne.s32.totalorder %s25, %s28
      %p37 = scmp.eq.s32.totalorder %s20, 1
      %p38 = por %p36, %p37
      %p39 = scmp.ne.s32.totalorder %s28, %s29
      %p40 = scmp.eq.s32.totalorder %s20, 0
      %p41 = por %p39, %p40
      %p42 = scmp.ne.s32.totalorder %s28, %s29
      %p43 = scmp.eq.s32.totalorder %s21, 1
      %p44 = por %p42, %p43
      %p46 = scmp.ne.s32.totalorder %s29, %s45
      %p47 = scmp.eq.s32.totalorder %s21, 0
      %p48 = por %p46, %p47
      %s50 = sadd.s32 %s49, 1
      %p53 = scmp.eq.s32.totalorder %s15, 1
      %p54 = scmp.ne.s32.totalorder %s49, %s51
      %p55 = scmp.eq.s32.totalorder %s15, 0
      %p56 = por %p54, %p55
      %p57 = scmp.ne.s32.totalorder %s49, %s51
      %p58 = scmp.eq.s32.totalorder %s20, 1
      %p59 = por %p57, %p58
      %p60 = scmp.ne.s32.totalorder %s51, %s52
      %p61 = scmp.eq.s32.totalorder %s20, 0
      %p62 = por %p60, %p61
      %p63 = scmp.ne.s32.totalorder %s51, %s52
      %p64 = scmp.eq.s32.totalorder %s21, 1
      %p65 = por %p63, %p64
      %p67 = scmp.ne.s32.totalorder %s52, %s66
      %p68 = scmp.eq.s32.totalorder %s21, 0
      %p69 = por %p67, %p68
      %s71 = sadd.s32 %s70, 1
      %p74 = scmp.eq.s32.totalorder %s15, 1
      %p75 = scmp.ne.s32.totalorder %s70, %s72
      %p76 = scmp.eq.s32.totalorder %s15, 0
      %p77 = por %p75, %p76
      %p78 = scmp.ne.s32.totalorder %s70, %s72
      %p79 = scmp.eq.s32.totalorder %s20, 1
      %p80 = por %p78, %p79
      %p81 = scmp.ne.s32.totalorder %s72, %s73
      %p82 = scmp.eq.s32.totalorder %s20, 0
      %p83 = por %p81, %p82
      %p84 = scmp.ne.s32.totalorder %s72, %s73
      %p85 = scmp.eq.s32.totalorder %s21, 1
      %p86 = por %p84, %p85
      %p88 = scmp.ne.s32.totalorder %s73, %s87
      %p89 = scmp.eq.s32.totalorder %s21, 0
      %p90 = por %p88, %p89
      %s91 = ssub.s32 %s15, %s22
      %p92 = scmp.eq.s32.totalorder %s91, 0
      %s94 = sadd.s32 %s93, 1
      %s95 = scalar_select %p92, %s93, %s94
      %p98 = pneg %p92
      %p99 = scmp.eq.s32.totalorder %s15, 1
      %p100 = por %p98, %p99
      %p101 = scmp.ne.s32.totalorder %s93, %s96
      %p102 = scmp.eq.s32.totalorder %s15, 0
      %p103 = por %p101, %p102
      %p104 = scmp.ne.s32.totalorder %s93, %s96
      %p105 = scmp.eq.s32.totalorder %s20, 1
      %p106 = por %p104, %p105
      %p107 = scmp.ne.s32.totalorder %s96, %s97
      %p108 = scmp.eq.s32.totalorder %s20, 0
      %p109 = por %p107, %p108
      %p110 = scmp.ne.s32.totalorder %s96, %s97
      %p111 = scmp.eq.s32.totalorder %s21, 1
      %p112 = por %p110, %p111
      %p114 = scmp.ne.s32.totalorder %s97, %s113
      %p115 = scmp.eq.s32.totalorder %s21, 0
      %p116 = por %p114, %p115
      %p117 = scmp.le.s32.totalorder 1, %s15
      %p118 = scmp.lt.s32.totalorder %s15, 3
      %p119 = pnand %p117, %p118
      %p120 = pneg %p119
      // Predicated region
      $region9: #{tpu_custom_call.1} parent=5 // pred_check
        _
      $region10: #{tpu_custom_call.1} parent=5 // pred_check_branch
        %122 = sbr.rel (%p119) target = $region12
      $region11: #{tpu_custom_call.1} parent=5 // pred_region
        %s123 = ssub.s32 %s15, 1
        // Predicated region
        $region13: #{tpu_custom_call.1} parent=11 // pred_check
          %p124 = pneg %p62
        $region14: #{tpu_custom_call.1} parent=11 // pred_check_branch
          %126 = sbr.rel (%p124) target = $region16
        $region15: #{tpu_custom_call.1} parent=11 // pred_region
          _
        $region16: #{tpu_custom_call.1} parent=11 // pred_fallthru
          _
        // Predicated region
        $region17: #{tpu_custom_call.1} parent=11 // pred_check
          %p127 = pneg %p83
        $region18: #{tpu_custom_call.1} parent=11 // pred_check_branch
          %129 = sbr.rel (%p127) target = $region20
        $region19: #{tpu_custom_call.1} parent=11 // pred_region
          _
        $region20: #{tpu_custom_call.1} parent=11 // pred_fallthru
          _
      $region12: #{tpu_custom_call.1} parent=5 // pred_fallthru
        _
      %p130 = scmp.lt.s32.totalorder %s15, 2
      // Predicated region
      $region21: #{tpu_custom_call.1} parent=5 // pred_check
        %p131 = pneg %p130
      $region22: #{tpu_custom_call.1} parent=5 // pred_check_branch
        %133 = sbr.rel (%p131) target = $region24
      $region23: #{tpu_custom_call.1} parent=5 // pred_region
        // Predicated region
        $region25: #{tpu_custom_call.1} parent=23 // pred_check
          %p134 = pneg %p35
        $region26: #{tpu_custom_call.1} parent=23 // pred_check_branch
          %136 = sbr.rel (%p134) target = $region28
        $region27: #{tpu_custom_call.1} parent=23 // pred_region
          %s137 = sand.u32 %s25, 1
          %s138 = scalar_lea.sflag [#allocation3], %s137
          %s139 = sand.u32 %s25, 1
          %s140 = smul.addr %s139, 64
          %s141 = scalar_lea.vmem [#allocation2], %s140
          %s142 = smul.u32 4, %s15
          %s144 = ssub.s32 1024, 1024
          %145 = vsyncadd %s138, %s144
          %s146 = smul.addr %s142, 2
          %s147 = smul.addr %s146, 128
          %s148 = scalar_lea.hbm %s0, %s147
          %s149 = sshll.u32 %s141, 4
          %s150 = int_to_ptr.vmem [resolvable:$true] %s149
          %155 = dma.hbm_to_vmem [thread:$0]  %s148, 1024, %s150, %s138, 128, 128, 8
        $region28: #{tpu_custom_call.1} parent=23 // pred_fallthru
          _
      $region24: #{tpu_custom_call.1} parent=5 // pred_fallthru
        _
      %p156 = scmp.le.s32.totalorder 1, %s15
      %p157 = scmp.lt.s32.totalorder %s15, 3
      %p158 = pnand %p156, %p157
      %p159 = pneg %p158
      // Predicated region
      $region29: #{tpu_custom_call.1} parent=5 // pred_check
        _
      $region30: #{tpu_custom_call.1} parent=5 // pred_check_branch
        %161 = sbr.rel (%p158) target = $region32
      $region31: #{tpu_custom_call.1} parent=5 // pred_region
        %s162 = ssub.s32 %s15, 1
        %s163 = sand.u32 %s28, 1
        %s164 = scalar_lea.sflag [#allocation3], %s163
        %s165 = sand.u32 %s28, 1
        %s166 = smul.addr %s165, 64
        %s167 = scalar_lea.vmem [#allocation2], %s166
        // Predicated region
        $region33: #{tpu_custom_call.1} parent=31 // pred_check
          %p168 = pneg %p41
        $region34: #{tpu_custom_call.1} parent=31 // pred_check_branch
          %170 = sbr.rel (%p168) target = $region36
        $region35: #{tpu_custom_call.1} parent=31 // pred_region
          %171 = dma.done %s164, 1024
        $region36: #{tpu_custom_call.1} parent=31 // pred_fallthru
          _
        %s172 = sand.u32 %s28, 1
        %s173 = scalar_lea.sflag [#allocation3], %s172
        %s174 = sand.u32 %s28, 1
        %s175 = smul.addr %s174, 64
        %s176 = scalar_lea.vmem [#allocation2], %s175
        %p177 = pneg %p41
        %p178 = pneg %p38
        %p179 = pneg %p62
        %p180 = pneg %p59
        %p181 = pneg %p83
        %p182 = pneg %p80
        %p183 = pneg %p109
        %p184 = pneg %p106
        %s185 = sand.u32 %s96, 1
        %s186 = scalar_lea.sflag [#allocation4], %s185
        %s187 = sand.u32 %s96, 1
        %s188 = smul.addr %s187, 32
        %s189 = scalar_lea.vmem [#allocation5], %s188
        %s190 = smul.u32 4, %s20
        %v191 = vld [vmem:[%s167] sm:$0xff]
        %v192 = vld [vmem:[%s167 + $0x8] sm:$0xff]
        %v193 = vld [vmem:[%s167 + $0x10] sm:$0xff]
        %v194 = vld [vmem:[%s167 + $0x18] sm:$0xff]
        %v195 = vld [vmem:[%s167 + $0x20] sm:$0xff]
        %v196 = vld [vmem:[%s167 + $0x28] sm:$0xff]
        %v197 = vld [vmem:[%s167 + $0x30] sm:$0xff]
        %v198 = vld [vmem:[%s167 + $0x38] sm:$0xff]
        %v199 = vld [vmem:[%s2] sm:$0xff]
        %v200 = vld [vmem:[%s2 + $0x8] sm:$0xff]
        %vm201 = vcmask 130048
        %v203 = vsel %vm201, %v191, 0
        %v206 = vsel %vm201, %v192, 0
        %v209 = vsel %vm201, %v193, 0
        %v212 = vsel %vm201, %v194, 0
        %v215 = vsel %vm201, %v195, 0
        %v218 = vsel %vm201, %v196, 0
        %v221 = vsel %vm201, %v197, 0
        %v224 = vsel %vm201, %v198, 0
        %226 = vmatprep.subr.mxu0 0.0
        %227 = vmatpush1.msra.mxu0 %v199
        %228 = vmatprep.subr.mxu0 0.0
        %229 = vmatpush1.msra.mxu0 %v200
        %230 = vmatprep.subr.mxu0 0.0
        %231 = vmatpush1.msra.mxu0 0.0
        %232 = vmatprep.subr.mxu0 0.0
        %233 = vmatpush1.msra.mxu0 0.0
        %234 = vmatprep.subr.mxu0 0.0
        %235 = vmatpush1.msra.mxu0 0.0
        %236 = vmatprep.subr.mxu0 0.0
        %237 = vmatpush1.msra.mxu0 0.0
        %238 = vmatprep.subr.mxu0 0.0
        %239 = vmatpush1.msra.mxu0 0.0
        %240 = vmatprep.subr.mxu0 0.0
        %241 = vmatpush1.msra.mxu0 0.0
        %242 = vmatprep.subr.mxu0 0.0
        %243 = vmatpush1.msra.mxu0 0.0
        %244 = vmatprep.subr.mxu0 0.0
        %245 = vmatpush1.msra.mxu0 0.0
        %246 = vmatprep.subr.mxu0 0.0
        %247 = vmatpush1.msra.mxu0 0.0
        %248 = vmatprep.subr.mxu0 0.0
        %249 = vmatpush1.msra.mxu0 0.0
        %250 = vmatprep.subr.mxu0 0.0
        %251 = vmatpush1.msra.mxu0 0.0
        %252 = vmatprep.subr.mxu0 0.0
        %253 = vmatpush1.msra.mxu0 0.0
        %254 = vmatprep.subr.mxu0 0.0
        %255 = vmatpush1.msra.mxu0 0.0
        %256 = vmatprep.subr.mxu0 0.0
        %257 = vmatpush1.msra.mxu0 0.0
        %258 = vmatprep.subr.mxu0 0.0
        %259 = vmatpush1.msra.mxu0 0.0
        %260 = vmatprep.subr.mxu0 0.0
        %261 = vmatpush1.msra.mxu0 0.0
        %262 = vmatprep.subr.mxu0 0.0
        %263 = vmatpush1.msra.mxu0 0.0
        %264 = vmatprep.subr.mxu0 0.0
        %265 = vmatpush1.msra.mxu0 0.0
        %266 = vmatprep.subr.mxu0 0.0
        %267 = vmatpush1.msra.mxu0 0.0
        %268 = vmatprep.subr.mxu0 0.0
        %269 = vmatpush1.msra.mxu0 0.0
        %270 = vmatprep.subr.mxu0 0.0
        %271 = vmatpush1.msra.mxu0 0.0
        %272 = vmatprep.subr.mxu0 0.0
        %273 = vmatpush1.msra.mxu0 0.0
        %274 = vmatprep.subr.mxu0 0.0
        %275 = vmatpush1.msra.mxu0 0.0
        %276 = vmatprep.subr.mxu0 0.0
        %277 = vmatpush1.msra.mxu0 0.0
        %278 = vmatprep.subr.mxu0 0.0
        %279 = vmatpush1.msra.mxu0 0.0
        %280 = vmatprep.subr.mxu0 0.0
        %281 = vmatpush1.msra.mxu0 0.0
        %282 = vmatprep.subr.mxu0 0.0
        %283 = vmatpush1.msra.mxu0 0.0
        %284 = vmatprep.subr.mxu0 0.0
        %285 = vmatpush1.msra.mxu0 0.0
        %286 = vmatprep.subr.mxu0 0.0
        %287 = vmatpush1.msra.mxu0 0.0
        %288 = vmatprep.subr.mxu0 0.0
        %289 = vmatpush1.msra.mxu0 0.0
        %290 = vmatprep.mubr.f32.mxu0 0.0
        %291 = vmatmul.mubr.f32.gmra.mrb[0].mxu0 %v203
        %v292 = vpop.f32.mrb[0].mxu0
        %v293 = vadd.f32 0.0, %v292
        %v294 = vpop.f32.mrb[0].mxu0
        %295 = vmatprep.mubr.f32.mxu0 0.0
        %296 = vmatmul.mubr.f32.gmra.mrb[0].mxu0 %v206
        %v297 = vpop.f32.mrb[0].mxu0
        %v298 = vadd.f32 0.0, %v297
        %v299 = vpop.f32.mrb[0].mxu0
        %300 = vmatprep.mubr.f32.mxu0 0.0
        %301 = vmatmul.mubr.f32.gmra.mrb[0].mxu0 %v209
        %v302 = vpop.f32.mrb[0].mxu0
        %v303 = vadd.f32 0.0, %v302
        %v304 = vpop.f32.mrb[0].mxu0
        %305 = vmatprep.mubr.f32.mxu0 0.0
        %306 = vmatmul.mubr.f32.gmra.mrb[0].mxu0 %v212
        %v307 = vpop.f32.mrb[0].mxu0
        %v308 = vadd.f32 0.0, %v307
        %v309 = vpop.f32.mrb[0].mxu0
        %310 = vmatprep.mubr.f32.mxu0 0.0
        %311 = vmatmul.mubr.f32.gmra.mrb[0].mxu0 %v215
        %v312 = vpop.f32.mrb[0].mxu0
        %v313 = vadd.f32 0.0, %v312
        %v314 = vpop.f32.mrb[0].mxu0
        %315 = vmatprep.mubr.f32.mxu0 0.0
        %316 = vmatmul.mubr.f32.gmra.mrb[0].mxu0 %v218
        %v317 = vpop.f32.mrb[0].mxu0
        %v318 = vadd.f32 0.0, %v317
        %v319 = vpop.f32.mrb[0].mxu0
        %320 = vmatprep.mubr.f32.mxu0 0.0
        %321 = vmatmul.mubr.f32.gmra.mrb[0].mxu0 %v221
        %v322 = vpop.f32.mrb[0].mxu0
        %v323 = vadd.f32 0.0, %v322
        %v324 = vpop.f32.mrb[0].mxu0
        %325 = vmatprep.mubr.f32.mxu0 0.0
        %326 = vmatmul.mubr.f32.gmra.mrb[0].mxu0 %v224
        %v327 = vpop.f32.mrb[0].mxu0
        %v328 = vadd.f32 0.0, %v327
        %v329 = vpop.f32.mrb[0].mxu0
        %330 = vdwg.mxu0
        %333 = vrot.lane.b32.xlu0 %v303, 32
        %v334 = vpop.permute.xlu0 %333
        %335 = vrot.lane.b32.xlu0 %v308, 32
        %v336 = vpop.permute.xlu0 %335
        %341 = vrot.lane.b32.xlu0 %v313, 64
        %v342 = vpop.permute.xlu0 %341
        %343 = vrot.lane.b32.xlu0 %v318, 64
        %v344 = vpop.permute.xlu0 %343
        %349 = vrot.lane.b32.xlu0 %v323, 96
        %v350 = vpop.permute.xlu0 %349
        %351 = vrot.lane.b32.xlu0 %v328, 96
        %v352 = vpop.permute.xlu0 %351
        %vm355 = vcmask 261120
        %v356 = vsel %vm355, %v293, %v334
        %v357 = vsel %vm355, %v298, %v336
        %vm358 = vcmask 523264
        %v359 = vsel %vm358, %v356, %v342
        %v360 = vsel %vm358, %v357, %v344
        %vm361 = vcmask 785408
        %v362 = vsel %vm361, %v359, %v350
        %v363 = vsel %vm361, %v360, %v352
        %v364 = vld [vmem:[%s1] sm:$0xff]
        %v365 = vld [vmem:[%s1 + $0x8] sm:$0xff]
        %v366 = vld [vmem:[%s1 + $0x10] sm:$0xff]
        %v367 = vld [vmem:[%s1 + $0x18] sm:$0xff]
        %v369 = vsel %vm201, %v364, 0
        %v372 = vsel %vm201, %v365, 0
        %v375 = vsel %vm201, %v366, 0
        %v378 = vsel %vm201, %v367, 0
        %380 = vmatprep.subr.mxu0 0.0
        %381 = vmatpush1.msra.mxu0 %v362
        %382 = vmatprep.subr.mxu0 0.0
        %383 = vmatpush1.msra.mxu0 %v363
        %384 = vmatprep.subr.mxu0 0.0
        %385 = vmatpush1.msra.mxu0 0.0
        %386 = vmatprep.subr.mxu0 0.0
        %387 = vmatpush1.msra.mxu0 0.0
        %388 = vmatprep.subr.mxu0 0.0
        %389 = vmatpush1.msra.mxu0 0.0
        %390 = vmatprep.subr.mxu0 0.0
        %391 = vmatpush1.msra.mxu0 0.0
        %392 = vmatprep.subr.mxu0 0.0
        %393 = vmatpush1.msra.mxu0 0.0
        %394 = vmatprep.subr.mxu0 0.0
        %395 = vmatpush1.msra.mxu0 0.0
        %396 = vmatprep.subr.mxu0 0.0
        %397 = vmatpush1.msra.mxu0 0.0
        %398 = vmatprep.subr.mxu0 0.0
        %399 = vmatpush1.msra.mxu0 0.0
        %400 = vmatprep.subr.mxu0 0.0
        %401 = vmatpush1.msra.mxu0 0.0
        %402 = vmatprep.subr.mxu0 0.0
        %403 = vmatpush1.msra.mxu0 0.0
        %404 = vmatprep.subr.mxu0 0.0
        %405 = vmatpush1.msra.mxu0 0.0
        %406 = vmatprep.subr.mxu0 0.0
        %407 = vmatpush1.msra.mxu0 0.0
        %408 = vmatprep.subr.mxu0 0.0
        %409 = vmatpush1.msra.mxu0 0.0
        %410 = vmatprep.subr.mxu0 0.0
        %411 = vmatpush1.msra.mxu0 0.0
        %412 = vmatprep.subr.mxu0 0.0
        %413 = vmatpush1.msra.mxu0 0.0
        %414 = vmatprep.subr.mxu0 0.0
        %415 = vmatpush1.msra.mxu0 0.0
        %416 = vmatprep.subr.mxu0 0.0
        %417 = vmatpush1.msra.mxu0 0.0
        %418 = vmatprep.subr.mxu0 0.0
        %419 = vmatpush1.msra.mxu0 0.0
        %420 = vmatprep.subr.mxu0 0.0
        %421 = vmatpush1.msra.mxu0 0.0
        %422 = vmatprep.subr.mxu0 0.0
        %423 = vmatpush1.msra.mxu0 0.0
        %424 = vmatprep.subr.mxu0 0.0
        %425 = vmatpush1.msra.mxu0 0.0
        %426 = vmatprep.subr.mxu0 0.0
        %427 = vmatpush1.msra.mxu0 0.0
        %428 = vmatprep.subr.mxu0 0.0
        %429 = vmatpush1.msra.mxu0 0.0
        %430 = vmatprep.subr.mxu0 0.0
        %431 = vmatpush1.msra.mxu0 0.0
        %432 = vmatprep.subr.mxu0 0.0
        %433 = vmatpush1.msra.mxu0 0.0
        %434 = vmatprep.subr.mxu0 0.0
        %435 = vmatpush1.msra.mxu0 0.0
        %436 = vmatprep.subr.mxu0 0.0
        %437 = vmatpush1.msra.mxu0 0.0
        %438 = vmatprep.subr.mxu0 0.0
        %439 = vmatpush1.msra.mxu0 0.0
        %440 = vmatprep.subr.mxu0 0.0
        %441 = vmatpush1.msra.mxu0 0.0
        %442 = vmatprep.subr.mxu0 0.0
        %443 = vmatpush1.msra.mxu0 0.0
        %444 = vmatprep.mubr.f32.mxu0 0.0
        %445 = vmatmul.mubr.f32.gmra.mrb[0].mxu0 %v369
        %v446 = vpop.f32.mrb[0].mxu0
        %v447 = vadd.f32 0.0, %v446
        %v448 = vpop.f32.mrb[0].mxu0
        %449 = vmatprep.mubr.f32.mxu0 0.0
        %450 = vmatmul.mubr.f32.gmra.mrb[0].mxu0 %v372
        %v451 = vpop.f32.mrb[0].mxu0
        %v452 = vadd.f32 0.0, %v451
        %v453 = vpop.f32.mrb[0].mxu0
        %454 = vmatprep.mubr.f32.mxu0 0.0
        %455 = vmatmul.mubr.f32.gmra.mrb[0].mxu0 %v375
        %v456 = vpop.f32.mrb[0].mxu0
        %v457 = vadd.f32 0.0, %v456
        %v458 = vpop.f32.mrb[0].mxu0
        %459 = vmatprep.mubr.f32.mxu0 0.0
        %460 = vmatmul.mubr.f32.gmra.mrb[0].mxu0 %v378
        %v461 = vpop.f32.mrb[0].mxu0
        %v462 = vadd.f32 0.0, %v461
        %v463 = vpop.f32.mrb[0].mxu0
        %464 = vdwg.mxu0
        %465 = vst [vmem:[%s189] sm:$0xff] %v447
        %466 = vst [vmem:[%s189 + $0x8] sm:$0xff] %v452
        %467 = vst [vmem:[%s189 + $0x10] sm:$0xff] %v457
        %468 = vst [vmem:[%s189 + $0x18] sm:$0xff] %v462
        %s469 = sand.u32 %s96, 1
        %s470 = scalar_lea.sflag [#allocation4], %s469
        %s471 = sand.u32 %s96, 1
        %s472 = smul.addr %s471, 32
        %s473 = scalar_lea.vmem [#allocation5], %s472
        // Predicated region
        $region37: #{tpu_custom_call.1} parent=31 // pred_check
          %p474 = pneg %p106
        $region38: #{tpu_custom_call.1} parent=31 // pred_check_branch
          %476 = sbr.rel (%p474) target = $region40
        $region39: #{tpu_custom_call.1} parent=31 // pred_region
          %s478 = ssub.s32 512, 512
          %479 = vsyncadd %s470, %s478
          %s480 = smul.addr %s20, 128
          %s481 = scalar_lea.hbm %s3, %s480
          %s482 = sshll.u32 %s473, 4
          %s483 = int_to_ptr.vmem [resolvable:$true] %s482
          %488 = dma.vmem_to_hbm [thread:$0]  %s483, 512, %s481, %s470, 128, 256, 8
        $region40: #{tpu_custom_call.1} parent=31 // pred_fallthru
          _
      $region32: #{tpu_custom_call.1} parent=5 // pred_fallthru
        _
      %p489 = scmp.le.s32.totalorder 2, %s15
      // Predicated region
      $region41: #{tpu_custom_call.1} parent=5 // pred_check
        %p490 = pneg %p489
      $region42: #{tpu_custom_call.1} parent=5 // pred_check_branch
        %492 = sbr.rel (%p490) target = $region44
      $region43: #{tpu_custom_call.1} parent=5 // pred_region
        %s493 = ssub.s32 %s15, 2
        // Predicated region
        $region45: #{tpu_custom_call.1} parent=43 // pred_check
          %p494 = pneg %p112
        $region46: #{tpu_custom_call.1} parent=43 // pred_check_branch
          %496 = sbr.rel (%p494) target = $region48
        $region47: #{tpu_custom_call.1} parent=43 // pred_region
          %s497 = sand.u32 %s97, 1
          %s498 = scalar_lea.sflag [#allocation4], %s497
          %s499 = sand.u32 %s97, 1
          %s500 = smul.addr %s499, 32
          %s501 = scalar_lea.vmem [#allocation5], %s500
          %502 = dma.done %s498, 512
        $region48: #{tpu_custom_call.1} parent=43 // pred_fallthru
          _
      $region44: #{tpu_custom_call.1} parent=5 // pred_fallthru
        _
    $region6: #{tpu_custom_call.1} parent=1 // loop_footer
      %s19 = sadd.s32 1, %s15
    $region7: #{tpu_custom_call.1} parent=1 // loop_footer_branch
      %14 = sbr.rel target = $region3
    $region8: #{tpu_custom_call.1} parent=1 // loop_exit
      _
    %503 = vsyncpa [#allocation3], 1
    %s504 = scalar_lea.sflag [#allocation3], 1
    %505 = vsyncpa %s504, 1
    %506 = vsyncpa [#allocation4], 1
    %s507 = scalar_lea.sflag [#allocation4], 1
    %508 = vsyncpa %s507, 1

</llo_original>
